<compile_context>
chip_gen: v7x
topology: tpu7x:2x2x1
jax: 0.10.0
libtpu: 0.0.40
codegen_flags: <defaults>
</compile_context>

<pallas_src>
import math

import jax
import jax.numpy as jnp
from jax.experimental import pallas as pl
from jax.experimental.pallas import tpu as pltpu

_LANES = 128
# Minimum sublane multiple per element byte-width (packed sublanes).
_MIN_SUBLANES = {4: 8, 2: 16, 1: 32}
# Target bytes per block buffer.  Input + output are each double buffered, so
# live VMEM ~= 4 * _BLOCK_BYTES ~= 8 MiB: safe on v5e/v6e/v7x.
_BLOCK_BYTES = 2 * 1024 * 1024
_VMEM_LIMIT_BYTES = 32 * 1024 * 1024


def _copy_kernel(x_ref, o_ref):
    # Straight VMEM-to-VMEM copy of the current (rows_blk, width) block.
    o_ref[...] = x_ref[...]


def _resolve_shape(total: int, shape):
    """Replicate torch.Tensor.view shape resolution (supports one -1)."""
    shape = list(shape)
    neg = [i for i, s in enumerate(shape) if s == -1]
    if len(neg) > 1:
        raise ValueError("only one dimension can be inferred (-1)")
    if neg:
        known = 1
        for i, s in enumerate(shape):
            if i != neg[0]:
                known *= s
        if known == 0 or total % known != 0:
            raise ValueError(f"shape {shape} is invalid for input of size {total}")
        shape[neg[0]] = total // known
    else:
        prod = math.prod(shape) if shape else 1
        if prod != total:
            raise ValueError(f"shape {shape} is invalid for input of size {total}")
    return tuple(shape)


def _choose_layout(total: int, itemsize: int):
    """Pick (min_sublanes, slab_width).  slab_width=None -> needs lane padding."""
    sub = _MIN_SUBLANES.get(itemsize, 8)
    for k in (32, 16, 8, 4, 2, 1):
        w = _LANES * k
        if total % w == 0:
            return sub, w
    return sub, None


def _copy_flat(flat, total: int, itemsize: int, width: int, sub: int):
    """Copy a length-`total` flat array (total % width == 0) through Pallas."""
    rows = total // width
    # Biggest block (multiple of the dtype's sublane minimum) under the budget.
    rows_blk = max(sub, (_BLOCK_BYTES // (width * itemsize)) // sub * sub)
    rows_blk = min(rows_blk, rows)  # if rows < sub this is the full dim => legal
    grid = ((rows + rows_blk - 1) // rows_blk,)

    flat2d = jnp.reshape(flat, (rows, width))
    copied = pl.pallas_call(
        _copy_kernel,
        out_shape=jax.ShapeDtypeStruct((rows, width), flat.dtype),
        grid_spec=pltpu.PrefetchScalarGridSpec(
            num_scalar_prefetch=0,
            grid=grid,
            in_specs=[pl.BlockSpec((rows_blk, width), lambda i: (i, 0))],
            out_specs=pl.BlockSpec((rows_blk, width), lambda i: (i, 0)),
        ),
        compiler_params=pltpu.CompilerParams(
            dimension_semantics=("parallel",),
            vmem_limit_bytes=_VMEM_LIMIT_BYTES,
        ),
        cost_estimate=pl.CostEstimate(
            flops=0, transcendentals=0, bytes_accessed=2 * total * itemsize),
        # In-place when the caller donates the buffer (e.g. inside a jit);
        # otherwise XLA inserts a defensive copy and the result is identical.
        input_output_aliases={0: 0},
    )(flat2d)
    return jnp.reshape(copied, (total,))


def reshape_pallas(x, *target_shape):
    """Pallas-backed equivalent of `x.view(*target_shape)` (contiguous input)."""
    total = x.size
    out_shape = _resolve_shape(total, target_shape)
    if total == 0:
        # Zero-size tensors: nothing to copy, metadata-only reshape.
        return jnp.reshape(x, out_shape)

    itemsize = x.dtype.itemsize
    sub, width = _choose_layout(total, itemsize)
    flat = jnp.reshape(x, (total,))

    if width is None:
        # Total not divisible by 128: pad only the small (<128-elem) remainder
        # so the kernel still sees a lane-aligned slab, then trim it back.
        width = _LANES
        padded_total = ((total + _LANES - 1) // _LANES) * _LANES
        flat = jnp.pad(flat, (0, padded_total - total))
        out_flat = _copy_flat(flat, padded_total, itemsize, width, sub)[:total]
    else:
        out_flat = _copy_flat(flat, total, itemsize, width, sub)

    return jnp.reshape(out_flat, out_shape)


class Reshape:
    """Mirror of the PyTorch module: Reshape(*shape)(x) == x.view(*shape)."""

    def __init__(self, *args):
        self.shape = args

    def __call__(self, x):
        return reshape_pallas(x, *self.shape)


if __name__ == "__main__":
    key = jax.random.PRNGKey(0)
    k1, k2, k3 = jax.random.split(key, 3)

    # Case 1 (matches VAE usage: un-flatten dense features back to NCHW).
    x1 = jax.random.normal(k1, (2, 1024), dtype=jnp.float32)
    out1 = jax.block_until_ready(Reshape(-1, 4, 16, 16)(x1))
    ref1 = jnp.reshape(x1, (-1, 4, 16, 16))
    assert out1.shape == (2, 4, 16, 16) and out1.dtype == x1.dtype
    assert bool(jnp.array_equal(out1, ref1))

    # Case 2: bf16 (exercises dtype-aware sublane handling), flatten direction.
    x2 = jax.random.normal(k2, (2, 4, 16, 16), dtype=jnp.bfloat16)
    out2 = jax.block_until_ready(Reshape(2, -1)(x2))
    assert out2.shape == (2, 1024) and out2.dtype == x2.dtype
    assert bool(jnp.array_equal(out2, jnp.reshape(x2, (2, -1))))

    # Case 3: total not divisible by 128 (exercises the small-pad fallback).
    x3 = jax.random.normal(k3, (3, 50), dtype=jnp.float32)
    out3 = jax.block_until_ready(Reshape(-1, 10, 15)(x3))
    assert out3.shape == (1, 10, 15) and out3.dtype == x3.dtype
    assert bool(jnp.array_equal(out3, jnp.reshape(x3, (-1, 10, 15))))

    print("KERNEL_OK")
</pallas_src>

<mosaic_0001>
module attributes {stable_mosaic.version = 11 : i64} {
  func.func @_copy_kernel(%arg0: i32, %arg1: memref<1x2048xf32, #tpu.memory_space<vmem>>, %arg2: memref<1x2048xf32, #tpu.memory_space<vmem>>) attributes {dimension_semantics = [#tpu.dimension_semantics<parallel>], iteration_bounds = array<i64: 1>, scalar_prefetch = 0 : i64, scratch_operands = 0 : i64, tpu.core_type = #tpu.core_type<tc>, window_params = [{transform_indices = @transform_0, window_bounds = array<i64: 1, 2048>}, {transform_indices = @transform_1, window_bounds = array<i64: 1, 2048>}]} {
    %c0 = arith.constant 0 : index
    %c0_0 = arith.constant 0 : index
    %0 = vector.load %arg1[%c0, %c0_0] : memref<1x2048xf32, #tpu.memory_space<vmem>>, vector<1x2048xf32>
    %c0_1 = arith.constant 0 : index
    %c0_2 = arith.constant 0 : index
    %1 = vector.load %arg2[%c0_1, %c0_2] : memref<1x2048xf32, #tpu.memory_space<vmem>>, vector<1x2048xf32>
    tpu.vector_store %arg2[%c0_1, %c0_2], %0 {strides = array<i32>} : memref<1x2048xf32, #tpu.memory_space<vmem>>, vector<1x2048xf32>,
    return
  }
  func.func @transform_0(%arg0: i32) -> (i32, i32) {
    %c0_i32 = arith.constant 0 : i32
    %c0_i32_0 = arith.constant 0 : i32
    return %arg0, %c0_i32 : i32, i32
  }
  func.func @transform_1(%arg0: i32) -> (i32, i32) {
    %c0_i32 = arith.constant 0 : i32
    %c0_i32_0 = arith.constant 0 : i32
    return %arg0, %c0_i32 : i32, i32
  }
}

</mosaic_0001>

<llo_original>
// kernel: tpu_custom_call.1
$region0: #{tpu_custom_call.1}
  #allocation0 [shape = 'u32[]', space=smem, size = 0x4, offset = 0x4, fixed_abs, tag = 'smem constant byte address 0x4 - core index']
  #allocation1 [shape = 'u32[144,128]{1,0:T(1,128)}', space=vmem, size = 0x12000, scoped, tag = 'internal scratch']
  %s0 = inlined_call_operand.hbm [shape: f32[1,2048], index: 0, kind: input, shape index: {}, may-alias: {0,1}]
  %s1 = inlined_call_operand.hbm [shape: f32[1,2048], index: 1, kind: output, shape index: {}, may-alias: {0,1}]
  %s2 = sld [smem:[#allocation0]]
  $region18: #{tpu_custom_call.1} parent=0
    _
  %s4 = ssub.s32 1, %s2
  %s5 = scalar_select 0, %s4, %s2
  $region1: #{tpu_custom_call.1} parent=0
    #allocation2 [shape = 'u8[8192]{0}', space=vmem, size = 0x2000, scoped, tag = 'input window, operand 0, single buffered']
    #allocation3 [shape = 's32[1]{0}', space=sflag, size = 0x4, scoped, tag = 'scoped memory for tpu_custom_call.1']
    #allocation4 [shape = 's32[1]{0}', space=sflag, size = 0x4, scoped, tag = 'scoped memory for tpu_custom_call.1']
    #allocation5 [shape = 'u8[8192]{0}', space=vmem, size = 0x2000, scoped, tag = 'output window, operand 0, single buffered']
    %6 = vsyncpa [#allocation3], 0
    %7 = vsyncpa [#allocation4], 0
    // Predicated region
    $region2: #{tpu_custom_call.1} parent=1 // pred_check
      _
    $region3: #{tpu_custom_call.1} parent=1 // pred_check_branch
      %9 = sbr.rel (0) target = $region5
    $region4: #{tpu_custom_call.1} parent=1 // pred_region
      %s11 = ssub.s32 256, 256
      %12 = vsyncadd [#allocation3], %s11
      %s14 = sshll.u32 [#allocation2], 4
      %s15 = int_to_ptr.vmem [resolvable:$true] %s14
      %17 = dma.hbm_to_vmem [thread:$0]  %s0, 256, %s15, [#allocation3]
    $region5: #{tpu_custom_call.1} parent=1 // pred_fallthru
      _
    // Predicated region
    $region6: #{tpu_custom_call.1} parent=1 // pred_check
      _
    $region7: #{tpu_custom_call.1} parent=1 // pred_check_branch
      %19 = sbr.rel (0) target = $region9
    $region8: #{tpu_custom_call.1} parent=1 // pred_region
      %20 = dma.done [#allocation3], 256
    $region9: #{tpu_custom_call.1} parent=1 // pred_fallthru
      _
    %v21 = vld [vmem:[#allocation2] sm:$0xff]
    %v22 = vld [vmem:[#allocation2 + $0x8] sm:$0xff]
    %23 = vst [vmem:[#allocation5] sm:$0xff] %v21
    %24 = vst [vmem:[#allocation5 + $0x8] sm:$0xff] %v22
    // Predicated region
    $region10: #{tpu_custom_call.1} parent=1 // pred_check
      _
    $region11: #{tpu_custom_call.1} parent=1 // pred_check_branch
      %26 = sbr.rel (0) target = $region13
    $region12: #{tpu_custom_call.1} parent=1 // pred_region
      %s28 = ssub.s32 256, 256
      %29 = vsyncadd [#allocation4], %s28
      %s31 = sshll.u32 [#allocation5], 4
      %s32 = int_to_ptr.vmem [resolvable:$true] %s31
      %34 = dma.vmem_to_hbm [thread:$0]  %s32, 256, %s1, [#allocation4]
    $region13: #{tpu_custom_call.1} parent=1 // pred_fallthru
      _
    // Predicated region
    $region14: #{tpu_custom_call.1} parent=1 // pred_check
      _
    $region15: #{tpu_custom_call.1} parent=1 // pred_check_branch
      %36 = sbr.rel (0) target = $region17
    $region16: #{tpu_custom_call.1} parent=1 // pred_region
      %37 = dma.done [#allocation4], 256
    $region17: #{tpu_custom_call.1} parent=1 // pred_fallthru
      _
    %38 = vsyncpa [#allocation3], 1
    %39 = vsyncpa [#allocation4], 1

</llo_original>
